<compile_context>
chip_gen: v5e
topology: v5e:2x2
jax: 0.10.0
libtpu: 0.0.40
codegen_flags: <defaults>
</compile_context>

<pallas_src>
import functools

import jax
import jax.numpy as jnp
from jax.experimental import pallas as pl
from jax.experimental.pallas import tpu as pltpu

HIDDEN = 128
LANE = 128
SUBLANE = 8
MAX_BATCH_TILE = 1024  # raised per review; double-buffered working set stays ~MBs


def _round_up(x, m):
    return ((x + m - 1) // m) * m


def _pick_batch_tile(B):
    """Even row split across grid steps; >=2 steps for B>16 (v7x 2-TC sharding)."""
    n_steps = pl.cdiv(B, MAX_BATCH_TILE)
    if B > 2 * SUBLANE:
        n_steps = max(n_steps, 2)
    tb = max(SUBLANE, _round_up(pl.cdiv(B, n_steps), SUBLANE))
    return tb


def _dueling_kernel(x_ref, w1_ref, b1_ref, w2_ref, b2_ref, wh_ref, bh_ref,
                    out_ref, *, n_action):
    w_dtype = w1_ref.dtype
    # fc1 + relu (f32 accumulation regardless of weight dtype)
    h1 = jnp.dot(x_ref[...].astype(w_dtype), w1_ref[...],
                 preferred_element_type=jnp.float32)
    h1 = jnp.maximum(h1 + b1_ref[...], 0.0)
    # fc2 + relu
    h2 = jnp.dot(h1.astype(w_dtype), w2_ref[...],
                 preferred_element_type=jnp.float32)
    h2 = jnp.maximum(h2 + b2_ref[...], 0.0)
    # fused head: cols [0, n_action) = advantage, col n_action = value, rest zero
    head = jnp.dot(h2.astype(w_dtype), wh_ref[...],
                   preferred_element_type=jnp.float32) + bh_ref[...]
    value = head[:, n_action:n_action + 1]                       # (TB, 1)
    # padded head columns are exactly zero by construction -> no lane mask needed
    adv_sum = jnp.sum(head, axis=1, keepdims=True) - value       # (TB, 1)
    adv_mean = adv_sum * (1.0 / n_action)
    # Q = A + (V - mean(A)); store only the n_action real columns.
    out_ref[...] = head[:, :n_action] + (value - adv_mean)


def prepare_params(params, n_action, param_dtype=jnp.bfloat16):
    """Pad / fuse raw Linear params ONCE (hoisted out of the per-call path).

    Returns (w1, b1, w2, b2, w_head, b_head) where w_head fuses the value and
    advantage heads: columns [0, n_action) = advantage, column n_action =
    value, remaining lanes zero.  Default param_dtype=bfloat16 runs the MXU at
    its native rate on all generations; accumulation stays float32 in-kernel.
    Pass param_dtype=jnp.float32 if bit-tight f32 Q-values are required.
    """
    w1, b1, w2, b2, wv, bv, wa, ba = params
    head_pad = _round_up(n_action + 1, LANE)
    wh = jnp.zeros((HIDDEN, head_pad), jnp.float32)
    wh = wh.at[:, :n_action].set(wa)
    wh = wh.at[:, n_action:n_action + 1].set(wv)
    bh = jnp.zeros((1, head_pad), jnp.float32)
    bh = bh.at[0, :n_action].set(ba)
    bh = bh.at[0, n_action].set(bv[0])
    return (w1.astype(param_dtype), b1[None, :].astype(jnp.float32),
            w2.astype(param_dtype), b2[None, :].astype(jnp.float32),
            wh.astype(param_dtype), bh.astype(jnp.float32))


def dueling_qnet_forward(x, prepared, n_action):
    """x: (B, n_state) float32 -> (B, n_action) float32."""
    w1_p, b1_p, w2_p, b2_p, wh_p, bh_p = prepared
    B, n_state = x.shape
    head_pad = wh_p.shape[1]

    tb = _pick_batch_tile(B)
    b_pad = _round_up(B, tb)

    x_p = jnp.pad(x, ((0, b_pad - B), (0, 0)))

    kernel = functools.partial(_dueling_kernel, n_action=n_action)

    nbytes = lambda a: a.size * a.dtype.itemsize
    cost = pl.CostEstimate(
        flops=2 * b_pad * HIDDEN * (n_state + HIDDEN + head_pad),
        transcendentals=0,
        bytes_accessed=int(nbytes(x_p) + nbytes(w1_p) + nbytes(b1_p)
                           + nbytes(w2_p) + nbytes(b2_p) + nbytes(wh_p)
                           + nbytes(bh_p) + b_pad * n_action * 4),
    )

    out = pl.pallas_call(
        kernel,
        out_shape=jax.ShapeDtypeStruct((b_pad, n_action), jnp.float32),
        grid_spec=pltpu.PrefetchScalarGridSpec(
            num_scalar_prefetch=0,
            grid=(b_pad // tb,),
            in_specs=[
                pl.BlockSpec((tb, n_state), lambda i: (i, 0)),       # x tile
                pl.BlockSpec((n_state, HIDDEN), lambda i: (0, 0)),   # w1 (resident)
                pl.BlockSpec((1, HIDDEN), lambda i: (0, 0)),         # b1
                pl.BlockSpec((HIDDEN, HIDDEN), lambda i: (0, 0)),    # w2
                pl.BlockSpec((1, HIDDEN), lambda i: (0, 0)),         # b2
                pl.BlockSpec((HIDDEN, head_pad), lambda i: (0, 0)),  # fused head W
                pl.BlockSpec((1, head_pad), lambda i: (0, 0)),       # fused head b
            ],
            out_specs=pl.BlockSpec((tb, n_action), lambda i: (i, 0)),  # narrow output
        ),
        compiler_params=pltpu.CompilerParams(
            dimension_semantics=("parallel",)),   # v7x: shard batch over 2 TCs
        cost_estimate=cost,
    )(x_p, w1_p, b1_p, w2_p, b2_p, wh_p, bh_p)

    return out[:B, :]


def init_params(key, n_state, n_action):
    """PyTorch-nn.Linear-style uniform init, deterministic from `key`."""
    ks = jax.random.split(key, 8)

    def lin(kw, kb, fan_in, fan_out):
        bound = 1.0 / jnp.sqrt(fan_in)
        w = jax.random.uniform(kw, (fan_in, fan_out), jnp.float32, -bound, bound)
        b = jax.random.uniform(kb, (fan_out,), jnp.float32, -bound, bound)
        return w, b

    w1, b1 = lin(ks[0], ks[1], n_state, HIDDEN)
    w2, b2 = lin(ks[2], ks[3], HIDDEN, HIDDEN)
    wv, bv = lin(ks[4], ks[5], HIDDEN, 1)
    wa, ba = lin(ks[6], ks[7], HIDDEN, n_action)
    return (w1, b1, w2, b2, wv, bv, wa, ba)


def reference_forward(x, params):
    w1, b1, w2, b2, wv, bv, wa, ba = params
    h = jnp.maximum(x @ w1 + b1, 0.0)
    h = jnp.maximum(h @ w2 + b2, 0.0)
    value = h @ wv + bv                     # (B, 1)
    adv = h @ wa + ba                       # (B, n_action)
    return value + adv - adv.mean(axis=1, keepdims=True)


if __name__ == "__main__":
    n_state, n_action, batch = 8, 4, 2
    key = jax.random.PRNGKey(0)
    k_param, k_x = jax.random.split(key)

    params = init_params(k_param, n_state, n_action)
    x = jax.random.normal(k_x, (batch, n_state), dtype=jnp.float32)
    ref = reference_forward(x, params)

    fwd = jax.jit(dueling_qnet_forward, static_argnums=(2,))

    # f32-prepared path: tight numerical check of the kernel itself.
    prepared_f32 = prepare_params(params, n_action, param_dtype=jnp.float32)
    out_f32 = jax.block_until_ready(fwd(x, prepared_f32, n_action))
    assert out_f32.shape == (batch, n_action)
    assert jnp.allclose(out_f32, ref, atol=1e-4, rtol=1e-4), "f32 path mismatch"

    # bf16-prepared path (production default): loose check, expected bf16 rounding.
    prepared_bf16 = prepare_params(params, n_action)
    out_bf16 = jax.block_until_ready(fwd(x, prepared_bf16, n_action))
    assert out_bf16.shape == (batch, n_action)
    assert jnp.allclose(out_bf16, ref, atol=5e-2, rtol=5e-2), "bf16 path mismatch"

    print("KERNEL_OK")
</pallas_src>

<mosaic_0001>
module attributes {stable_mosaic.version = 11 : i64} {
  func.func @_dueling_kernel(%arg0: i32, %arg1: memref<8x8xf32, #tpu.memory_space<vmem>>, %arg2: memref<8x128xf32, #tpu.memory_space<vmem>>, %arg3: memref<1x128xf32, #tpu.memory_space<vmem>>, %arg4: memref<128x128xf32, #tpu.memory_space<vmem>>, %arg5: memref<1x128xf32, #tpu.memory_space<vmem>>, %arg6: memref<128x128xf32, #tpu.memory_space<vmem>>, %arg7: memref<1x128xf32, #tpu.memory_space<vmem>>, %arg8: memref<8x4xf32, #tpu.memory_space<vmem>>) attributes {dimension_semantics = [#tpu.dimension_semantics<parallel>], iteration_bounds = array<i64: 1>, scalar_prefetch = 0 : i64, scratch_operands = 0 : i64, tpu.core_type = #tpu.core_type<tc>, window_params = [{transform_indices = @transform_0, window_bounds = array<i64: 8, 8>}, {pipeline_mode = #tpu.pipeline_mode<synchronous>, transform_indices = @transform_1, window_bounds = array<i64: 8, 128>}, {pipeline_mode = #tpu.pipeline_mode<synchronous>, transform_indices = @transform_2, window_bounds = array<i64: 1, 128>}, {pipeline_mode = #tpu.pipeline_mode<synchronous>, transform_indices = @transform_3, window_bounds = array<i64: 128, 128>}, {pipeline_mode = #tpu.pipeline_mode<synchronous>, transform_indices = @transform_4, window_bounds = array<i64: 1, 128>}, {pipeline_mode = #tpu.pipeline_mode<synchronous>, transform_indices = @transform_5, window_bounds = array<i64: 128, 128>}, {pipeline_mode = #tpu.pipeline_mode<synchronous>, transform_indices = @transform_6, window_bounds = array<i64: 1, 128>}, {transform_indices = @transform_7, window_bounds = array<i64: 8, 4>}]} {
    %c0 = arith.constant 0 : index
    %c0_0 = arith.constant 0 : index
    %0 = vector.load %arg1[%c0, %c0_0] : memref<8x8xf32, #tpu.memory_space<vmem>>, vector<8x8xf32>
    %c0_1 = arith.constant 0 : index
    %c0_2 = arith.constant 0 : index
    %1 = vector.load %arg2[%c0_1, %c0_2] : memref<8x128xf32, #tpu.memory_space<vmem>>, vector<8x128xf32>
    %cst = arith.constant dense<0.000000e+00> : vector<8x128xf32>
    %2 = tpu.matmul %0, %1, %cst {dimension_numbers = #tpu.dot_dimension_numbers<[1], [0], [0], [1], [0, 0, 1, 1], [], []>} : vector<8x8xf32>, vector<8x128xf32>, vector<8x128xf32> -> vector<8x128xf32>
    %c0_3 = arith.constant 0 : index
    %c0_4 = arith.constant 0 : index
    %3 = vector.load %arg3[%c0_3, %c0_4] : memref<1x128xf32, #tpu.memory_space<vmem>>, vector<1x128xf32>
    %4 = vector.broadcast %3 : vector<1x128xf32> to vector<8x128xf32>
    %5 = arith.addf %2, %4 : vector<8x128xf32>
    %cst_5 = arith.constant 0.000000e+00 : f32
    %6 = vector.broadcast %cst_5 : f32 to vector<8x128xf32>
    %7 = arith.maximumf %5, %6 : vector<8x128xf32>
    %c0_6 = arith.constant 0 : index
    %c0_7 = arith.constant 0 : index
    %8 = vector.load %arg4[%c0_6, %c0_7] : memref<128x128xf32, #tpu.memory_space<vmem>>, vector<128x128xf32>
    %cst_8 = arith.constant dense<0.000000e+00> : vector<8x128xf32>
    %9 = tpu.matmul %7, %8, %cst_8 {dimension_numbers = #tpu.dot_dimension_numbers<[1], [0], [0], [1], [0, 0, 1, 1], [], []>} : vector<8x128xf32>, vector<128x128xf32>, vector<8x128xf32> -> vector<8x128xf32>
    %c0_9 = arith.constant 0 : index
    %c0_10 = arith.constant 0 : index
    %10 = vector.load %arg5[%c0_9, %c0_10] : memref<1x128xf32, #tpu.memory_space<vmem>>, vector<1x128xf32>
    %11 = vector.broadcast %10 : vector<1x128xf32> to vector<8x128xf32>
    %12 = arith.addf %9, %11 : vector<8x128xf32>
    %cst_11 = arith.constant 0.000000e+00 : f32
    %13 = vector.broadcast %cst_11 : f32 to vector<8x128xf32>
    %14 = arith.maximumf %12, %13 : vector<8x128xf32>
    %c0_12 = arith.constant 0 : index
    %c0_13 = arith.constant 0 : index
    %15 = vector.load %arg6[%c0_12, %c0_13] : memref<128x128xf32, #tpu.memory_space<vmem>>, vector<128x128xf32>
    %cst_14 = arith.constant dense<0.000000e+00> : vector<8x128xf32>
    %16 = tpu.matmul %14, %15, %cst_14 {dimension_numbers = #tpu.dot_dimension_numbers<[1], [0], [0], [1], [0, 0, 1, 1], [], []>} : vector<8x128xf32>, vector<128x128xf32>, vector<8x128xf32> -> vector<8x128xf32>
    %c0_15 = arith.constant 0 : index
    %c0_16 = arith.constant 0 : index
    %17 = vector.load %arg7[%c0_15, %c0_16] : memref<1x128xf32, #tpu.memory_space<vmem>>, vector<1x128xf32>
    %18 = vector.broadcast %17 : vector<1x128xf32> to vector<8x128xf32>
    %19 = arith.addf %16, %18 : vector<8x128xf32>
    %20 = vector.extract_strided_slice %19 {offsets = [0, 4], sizes = [8, 1], strides = [1, 1]} : vector<8x128xf32> to vector<8x1xf32>
    %cst_17 = arith.constant dense<0.000000e+00> : vector<8xf32>
    %21 = vector.multi_reduction <add>, %19, %cst_17 [1] : vector<8x128xf32> to vector<8xf32>
    %22 = vector.shape_cast %21 : vector<8xf32> to vector<8x1xf32>
    %23 = arith.subf %22, %20 : vector<8x1xf32>
    %cst_18 = arith.constant 2.500000e-01 : f32
    %24 = vector.broadcast %cst_18 : f32 to vector<8x1xf32>
    %25 = arith.mulf %23, %24 : vector<8x1xf32>
    %26 = vector.extract_strided_slice %19 {offsets = [0, 0], sizes = [8, 4], strides = [1, 1]} : vector<8x128xf32> to vector<8x4xf32>
    %27 = arith.subf %20, %25 : vector<8x1xf32>
    %28 = vector.broadcast %27 : vector<8x1xf32> to vector<8x4xf32>
    %29 = arith.addf %26, %28 : vector<8x4xf32>
    %c0_19 = arith.constant 0 : index
    %c0_20 = arith.constant 0 : index
    %30 = vector.load %arg8[%c0_19, %c0_20] : memref<8x4xf32, #tpu.memory_space<vmem>>, vector<8x4xf32>
    tpu.vector_store %arg8[%c0_19, %c0_20], %29 {strides = array<i32>} : memref<8x4xf32, #tpu.memory_space<vmem>>, vector<8x4xf32>,
    return
  }
  func.func @transform_0(%arg0: i32) -> (i32, i32) {
    %c0_i32 = arith.constant 0 : i32
    %c0_i32_0 = arith.constant 0 : i32
    return %arg0, %c0_i32 : i32, i32
  }
  func.func @transform_1(%arg0: i32) -> (i32, i32) {
    %c0_i32 = arith.constant 0 : i32
    %c0_i32_0 = arith.constant 0 : i32
    %c0_i32_1 = arith.constant 0 : i32
    return %c0_i32, %c0_i32_0 : i32, i32
  }
  func.func @transform_2(%arg0: i32) -> (i32, i32) {
    %c0_i32 = arith.constant 0 : i32
    %c0_i32_0 = arith.constant 0 : i32
    %c0_i32_1 = arith.constant 0 : i32
    return %c0_i32, %c0_i32_0 : i32, i32
  }
  func.func @transform_3(%arg0: i32) -> (i32, i32) {
    %c0_i32 = arith.constant 0 : i32
    %c0_i32_0 = arith.constant 0 : i32
    %c0_i32_1 = arith.constant 0 : i32
    return %c0_i32, %c0_i32_0 : i32, i32
  }
  func.func @transform_4(%arg0: i32) -> (i32, i32) {
    %c0_i32 = arith.constant 0 : i32
    %c0_i32_0 = arith.constant 0 : i32
    %c0_i32_1 = arith.constant 0 : i32
    return %c0_i32, %c0_i32_0 : i32, i32
  }
  func.func @transform_5(%arg0: i32) -> (i32, i32) {
    %c0_i32 = arith.constant 0 : i32
    %c0_i32_0 = arith.constant 0 : i32
    %c0_i32_1 = arith.constant 0 : i32
    return %c0_i32, %c0_i32_0 : i32, i32
  }
  func.func @transform_6(%arg0: i32) -> (i32, i32) {
    %c0_i32 = arith.constant 0 : i32
    %c0_i32_0 = arith.constant 0 : i32
    %c0_i32_1 = arith.constant 0 : i32
    return %c0_i32, %c0_i32_0 : i32, i32
  }
  func.func @transform_7(%arg0: i32) -> (i32, i32) {
    %c0_i32 = arith.constant 0 : i32
    %c0_i32_0 = arith.constant 0 : i32
    return %arg0, %c0_i32 : i32, i32
  }
}

</mosaic_0001>

<llo_original>
// kernel: dueling_qnet_forward.1
$region0: #{dueling_qnet_forward.1}
  #allocation0 [shape = 'u32[]', space=smem, size = 0x4, offset = 0x4, fixed_abs, tag = 'smem constant byte address 0x4 - core index']
  #allocation1 [shape = 'u32[72,128]{1,0:T(1,128)}', space=vmem, size = 0x9000, scoped, tag = 'internal scratch']
  %s0 = inlined_call_operand.vmem [shape: f32[8,8], index: 0, kind: input, shape index: {}]
  %s1 = inlined_call_operand.vmem [shape: f32[8,128], index: 1, kind: input, shape index: {}]
  %s2 = inlined_call_operand.vmem [shape: f32[1,128], index: 2, kind: input, shape index: {}]
  %s3 = inlined_call_operand.hbm [shape: f32[128,128], index: 3, kind: input, shape index: {}]
  %s4 = inlined_call_operand.vmem [shape: f32[1,128], index: 4, kind: input, shape index: {}]
  %s5 = inlined_call_operand.hbm [shape: f32[128,128], index: 5, kind: input, shape index: {}]
  %s6 = inlined_call_operand.vmem [shape: f32[1,128], index: 6, kind: input, shape index: {}]
  %s7 = inlined_call_operand.vmem [shape: f32[8,4], index: 7, kind: output, shape index: {}]
  %s8 = sld [smem:[#allocation0]]
  $region46: #{dueling_qnet_forward.1} parent=0
    _
  %s10 = ssub.s32 1, %s8
  %s11 = scalar_select 0, %s10, %s8
  $region1: #{dueling_qnet_forward.1} parent=0
    #allocation2 [shape = 'u8[65536]{0}', space=vmem, size = 0x10000, scoped, tag = 'input window, operand 3, single buffered']
    #allocation3 [shape = 's32[1]{0}', space=sflag, size = 0x4, scoped, tag = 'scoped memory for dueling_qnet_forward.1']
    #allocation4 [shape = 'u8[65536]{0}', space=vmem, size = 0x10000, scoped, tag = 'input window, operand 5, single buffered']
    #allocation5 [shape = 's32[1]{0}', space=sflag, size = 0x4, scoped, tag = 'scoped memory for dueling_qnet_forward.1']
    %12 = vsyncpa [#allocation3], 0
    %13 = vsyncpa [#allocation5], 0
    // Predicated region
    $region2: #{dueling_qnet_forward.1} parent=1 // pred_check
      _
    $region3: #{dueling_qnet_forward.1} parent=1 // pred_check_branch
      %15 = sbr.rel (0) target = $region5
    $region4: #{dueling_qnet_forward.1} parent=1 // pred_region
      _
    $region5: #{dueling_qnet_forward.1} parent=1 // pred_fallthru
      _
    // Predicated region
    $region6: #{dueling_qnet_forward.1} parent=1 // pred_check
      _
    $region7: #{dueling_qnet_forward.1} parent=1 // pred_check_branch
      %17 = sbr.rel (0) target = $region9
    $region8: #{dueling_qnet_forward.1} parent=1 // pred_region
      _
    $region9: #{dueling_qnet_forward.1} parent=1 // pred_fallthru
      _
    // Predicated region
    $region10: #{dueling_qnet_forward.1} parent=1 // pred_check
      _
    $region11: #{dueling_qnet_forward.1} parent=1 // pred_check_branch
      %19 = sbr.rel (0) target = $region13
    $region12: #{dueling_qnet_forward.1} parent=1 // pred_region
      _
    $region13: #{dueling_qnet_forward.1} parent=1 // pred_fallthru
      _
    // Predicated region
    $region14: #{dueling_qnet_forward.1} parent=1 // pred_check
      _
    $region15: #{dueling_qnet_forward.1} parent=1 // pred_check_branch
      %21 = sbr.rel (0) target = $region17
    $region16: #{dueling_qnet_forward.1} parent=1 // pred_region
      %23 = vsyncadd [#allocation3], 0
      %s24 = sshll.u32 %s3, 4
      %s25 = int_to_ptr.hbm [resolvable:$true] %s24
      %s26 = sshll.u32 [#allocation2], 4
      %s27 = int_to_ptr.vmem [resolvable:$true] %s26
      %32 = dma.hbm_to_vmem [thread:$0]  %s25, 2048, %s27, [#allocation3], 128, 128, 8
    $region17: #{dueling_qnet_forward.1} parent=1 // pred_fallthru
      _
    // Predicated region
    $region18: #{dueling_qnet_forward.1} parent=1 // pred_check
      _
    $region19: #{dueling_qnet_forward.1} parent=1 // pred_check_branch
      %34 = sbr.rel (0) target = $region21
    $region20: #{dueling_qnet_forward.1} parent=1 // pred_region
      _
    $region21: #{dueling_qnet_forward.1} parent=1 // pred_fallthru
      _
    // Predicated region
    $region22: #{dueling_qnet_forward.1} parent=1 // pred_check
      _
    $region23: #{dueling_qnet_forward.1} parent=1 // pred_check_branch
      %36 = sbr.rel (0) target = $region25
    $region24: #{dueling_qnet_forward.1} parent=1 // pred_region
      %38 = vsyncadd [#allocation5], 0
      %s39 = sshll.u32 %s5, 4
      %s40 = int_to_ptr.hbm [resolvable:$true] %s39
      %s41 = sshll.u32 [#allocation4], 4
      %s42 = int_to_ptr.vmem [resolvable:$true] %s41
      %47 = dma.hbm_to_vmem [thread:$0]  %s40, 2048, %s42, [#allocation5], 128, 128, 8
    $region25: #{dueling_qnet_forward.1} parent=1 // pred_fallthru
      _
    // Predicated region
    $region26: #{dueling_qnet_forward.1} parent=1 // pred_check
      _
    $region27: #{dueling_qnet_forward.1} parent=1 // pred_check_branch
      %49 = sbr.rel (0) target = $region29
    $region28: #{dueling_qnet_forward.1} parent=1 // pred_region
      _
    $region29: #{dueling_qnet_forward.1} parent=1 // pred_fallthru
      _
    // Predicated region
    $region30: #{dueling_qnet_forward.1} parent=1 // pred_check
      _
    $region31: #{dueling_qnet_forward.1} parent=1 // pred_check_branch
      %51 = sbr.rel (0) target = $region33
    $region32: #{dueling_qnet_forward.1} parent=1 // pred_region
      %53 = dma.done [#allocation3], 2048
    $region33: #{dueling_qnet_forward.1} parent=1 // pred_fallthru
      _
    // Predicated region
    $region34: #{dueling_qnet_forward.1} parent=1 // pred_check
      _
    $region35: #{dueling_qnet_forward.1} parent=1 // pred_check_branch
      %55 = sbr.rel (0) target = $region37
    $region36: #{dueling_qnet_forward.1} parent=1 // pred_region
      %57 = dma.done [#allocation5], 2048
    $region37: #{dueling_qnet_forward.1} parent=1 // pred_fallthru
      _
    %v58 = vld [vmem:[%s0] sm:$0xff]
    %v59 = vld [vmem:[%s1] sm:$0xff]
    %v60 = vld [vmem:[%s2] sm:$0x1]
    %v62 = vperm.slane %v60, 0
    %vm64 = vcmask 64512
    %v66 = vsel %vm64, %v58, 0
    %68 = vmatpush.msra.mxu0 0.0
    %69 = vmatpush.msra.mxu0 0.0
    %70 = vmatpush.msra.mxu0 0.0
    %71 = vmatpush.msra.mxu0 0.0
    %72 = vmatpush.msra.mxu0 0.0
    %73 = vmatpush.msra.mxu0 0.0
    %74 = vmatpush.msra.mxu0 0.0
    %75 = vmatpush.msra.mxu0 0.0
    %76 = vmatpush.msra.mxu0 0.0
    %77 = vmatpush.msra.mxu0 0.0
    %78 = vmatpush.msra.mxu0 0.0
    %79 = vmatpush.msra.mxu0 0.0
    %80 = vmatpush.msra.mxu0 0.0
    %81 = vmatpush.msra.mxu0 0.0
    %82 = vmatpush.msra.mxu0 0.0
    %83 = vmatpush.msra.mxu0 %v59
    %84 = vmatmul.f32.gmra.mxu0 %v66
    %v85 = vpop.f32.mrf.mxu0
    %v86 = vadd.f32 %v62, %v85
    %87 = vdwg.mxu0
    %v88 = vmax.f32 %v86, 0.0
    %v89 = vld [vmem:[#allocation2] sm:$0xff]
    %v90 = vld [vmem:[#allocation2 + $0x8] sm:$0xff]
    %v91 = vld [vmem:[#allocation2 + $0x10] sm:$0xff]
    %v92 = vld [vmem:[#allocation2 + $0x18] sm:$0xff]
    %v93 = vld [vmem:[#allocation2 + $0x20] sm:$0xff]
    %v94 = vld [vmem:[#allocation2 + $0x28] sm:$0xff]
    %v95 = vld [vmem:[#allocation2 + $0x30] sm:$0xff]
    %v96 = vld [vmem:[#allocation2 + $0x38] sm:$0xff]
    %v97 = vld [vmem:[#allocation2 + $0x40] sm:$0xff]
    %v98 = vld [vmem:[#allocation2 + $0x48] sm:$0xff]
    %v99 = vld [vmem:[#allocation2 + $0x50] sm:$0xff]
    %v100 = vld [vmem:[#allocation2 + $0x58] sm:$0xff]
    %v101 = vld [vmem:[#allocation2 + $0x60] sm:$0xff]
    %v102 = vld [vmem:[#allocation2 + $0x68] sm:$0xff]
    %v103 = vld [vmem:[#allocation2 + $0x70] sm:$0xff]
    %v104 = vld [vmem:[#allocation2 + $0x78] sm:$0xff]
    %v105 = vld [vmem:[%s4] sm:$0x1]
    %v107 = vperm.slane %v105, 0
    %109 = vmatpush.msra.mxu0 %v104
    %110 = vmatpush.msra.mxu0 %v103
    %111 = vmatpush.msra.mxu0 %v102
    %112 = vmatpush.msra.mxu0 %v101
    %113 = vmatpush.msra.mxu0 %v100
    %114 = vmatpush.msra.mxu0 %v99
    %115 = vmatpush.msra.mxu0 %v98
    %116 = vmatpush.msra.mxu0 %v97
    %117 = vmatpush.msra.mxu0 %v96
    %118 = vmatpush.msra.mxu0 %v95
    %119 = vmatpush.msra.mxu0 %v94
    %120 = vmatpush.msra.mxu0 %v93
    %121 = vmatpush.msra.mxu0 %v92
    %122 = vmatpush.msra.mxu0 %v91
    %123 = vmatpush.msra.mxu0 %v90
    %124 = vmatpush.msra.mxu0 %v89
    %125 = vmatmul.f32.gmra.mxu0 %v88
    %v126 = vpop.f32.mrf.mxu0
    %v127 = vadd.f32 %v107, %v126
    %128 = vdwg.mxu0
    %v129 = vmax.f32 %v127, 0.0
    %v130 = vld [vmem:[#allocation4] sm:$0xff]
    %v131 = vld [vmem:[#allocation4 + $0x8] sm:$0xff]
    %v132 = vld [vmem:[#allocation4 + $0x10] sm:$0xff]
    %v133 = vld [vmem:[#allocation4 + $0x18] sm:$0xff]
    %v134 = vld [vmem:[#allocation4 + $0x20] sm:$0xff]
    %v135 = vld [vmem:[#allocation4 + $0x28] sm:$0xff]
    %v136 = vld [vmem:[#allocation4 + $0x30] sm:$0xff]
    %v137 = vld [vmem:[#allocation4 + $0x38] sm:$0xff]
    %v138 = vld [vmem:[#allocation4 + $0x40] sm:$0xff]
    %v139 = vld [vmem:[#allocation4 + $0x48] sm:$0xff]
    %v140 = vld [vmem:[#allocation4 + $0x50] sm:$0xff]
    %v141 = vld [vmem:[#allocation4 + $0x58] sm:$0xff]
    %v142 = vld [vmem:[#allocation4 + $0x60] sm:$0xff]
    %v143 = vld [vmem:[#allocation4 + $0x68] sm:$0xff]
    %v144 = vld [vmem:[#allocation4 + $0x70] sm:$0xff]
    %v145 = vld [vmem:[#allocation4 + $0x78] sm:$0xff]
    %v146 = vld [vmem:[%s6] sm:$0x1]
    %v148 = vperm.slane %v146, 0
    %150 = vmatpush.msra.mxu0 %v145
    %151 = vmatpush.msra.mxu0 %v144
    %152 = vmatpush.msra.mxu0 %v143
    %153 = vmatpush.msra.mxu0 %v142
    %154 = vmatpush.msra.mxu0 %v141
    %155 = vmatpush.msra.mxu0 %v140
    %156 = vmatpush.msra.mxu0 %v139
    %157 = vmatpush.msra.mxu0 %v138
    %158 = vmatpush.msra.mxu0 %v137
    %159 = vmatpush.msra.mxu0 %v136
    %160 = vmatpush.msra.mxu0 %v135
    %161 = vmatpush.msra.mxu0 %v134
    %162 = vmatpush.msra.mxu0 %v133
    %163 = vmatpush.msra.mxu0 %v132
    %164 = vmatpush.msra.mxu0 %v131
    %165 = vmatpush.msra.mxu0 %v130
    %166 = vmatmul.f32.gmra.mxu0 %v129
    %v167 = vpop.f32.mrf.mxu0
    %v168 = vadd.f32 %v148, %v167
    %169 = vdwg.mxu0
    %170 = vadd.xlane.f32.xlu0 %v168
    %v171 = vpop.xlane.xlu0 %170
    %v172 = vsub.f32 %v171, %v168
    %v173 = vmul.f32 %v172, 0.25
    %v174 = vsub.f32 %v168, %v173
    %176 = vset.pattern.permute.xlu0 4
    %177 = vperm.xlu0 %176, %v174
    %v178 = vpop.permute.xlu0 %177
    %v180 = vadd.f32 %v168, %v178
    %vm181 = vcmask 31744
    %182 = vst.msk [vmem:[%s7] sm:$0xff] %vm181, %v180
    // Predicated region
    $region38: #{dueling_qnet_forward.1} parent=1 // pred_check
      _
    $region39: #{dueling_qnet_forward.1} parent=1 // pred_check_branch
      %184 = sbr.rel (0) target = $region41
    $region40: #{dueling_qnet_forward.1} parent=1 // pred_region
      _
    $region41: #{dueling_qnet_forward.1} parent=1 // pred_fallthru
      _
    // Predicated region
    $region42: #{dueling_qnet_forward.1} parent=1 // pred_check
      _
    $region43: #{dueling_qnet_forward.1} parent=1 // pred_check_branch
      %186 = sbr.rel (0) target = $region45
    $region44: #{dueling_qnet_forward.1} parent=1 // pred_region
      _
    $region45: #{dueling_qnet_forward.1} parent=1 // pred_fallthru
      _
    %187 = vsyncpa [#allocation3], 1
    %188 = vsyncpa [#allocation5], 1

</llo_original>
